<compile_context>
chip_gen: v5e
topology: v5e:2x2
jax: 0.10.0
libtpu: 0.0.40
codegen_flags: <defaults>
</compile_context>

<pallas_src>
import math

import jax
import jax.numpy as jnp
from jax.experimental import pallas as pl
from jax.experimental.pallas import tpu as pltpu

HID = 16        # hidden width of every layer (and padded output width)
TB_MAX = 8192   # max batch-tile rows (f32 (8192, 16) tile = 512 KiB)


def mlp_kernel(x_ref, w1_ref, w_ref, b_ref, o_ref):
    # x_ref : (tb, F)        native-width input tile
    # w1_ref: (F, HID)       layer-1 weight (resident)
    # w_ref : (3, HID, HID)  packed w2/w3/w4 (w4 zero-padded on output cols)
    # b_ref : (4, HID)       packed b1..b4  (b4 zero-padded)
    # o_ref : (tb, HID)      padded layer-4 output (cols >= out_size are 0)
    x = x_ref[...]

    # linear1 + ReLU  (small-K matmul; F = input_size is a compile-time const)
    h = jnp.dot(x, w1_ref[...], preferred_element_type=jnp.float32) + b_ref[0:1, :]
    h = jnp.maximum(h, 0.0)

    # linear2 + ReLU
    h = jnp.dot(h, w_ref[0], preferred_element_type=jnp.float32) + b_ref[1:2, :]
    h = jnp.maximum(h, 0.0)

    # linear3 + ReLU
    h = jnp.dot(h, w_ref[1], preferred_element_type=jnp.float32) + b_ref[2:3, :]
    h = jnp.maximum(h, 0.0)

    # output_layer (no activation); padded output columns stay exactly zero.
    y = jnp.dot(h, w_ref[2], preferred_element_type=jnp.float32) + b_ref[3:4, :]

    # Full-width (16-lane) store instead of a 2-lane masked store.
    o_ref[...] = y.astype(o_ref.dtype)


def _round_up(n, m):
    return ((n + m - 1) // m) * m


def _pick_tb(bp):
    """Batch tile: as large as possible, but >= 2 grid steps when the batch
    can be split so both v7x TensorCores get work on the 'parallel' axis."""
    if bp <= 8:
        return bp
    half = _round_up(-(-bp // 2), 8)   # ceil(bp/2) rounded up to sublane granule
    return min(half, TB_MAX)


def fully_connected_forward(x, w1, packed_w, packed_b, out_size, tb=None):
    """x: (B, input_size) f32; w1: (input_size, HID);
    packed_w: (3, HID, HID); packed_b: (4, HID).  Returns (B, out_size)."""
    B, F = x.shape

    # Only round the batch up to the sublane granule (<= 7 extra rows).
    bp = _round_up(B, 8)
    if bp != B:
        x = jnp.pad(x, ((0, bp - B), (0, 0)))

    if tb is None:
        tb = _pick_tb(bp)
    grid = pl.cdiv(bp, tb)   # uneven tail block is clamped by Pallas

    out = pl.pallas_call(
        mlp_kernel,
        out_shape=jax.ShapeDtypeStruct((bp, HID), jnp.float32),
        grid_spec=pltpu.PrefetchScalarGridSpec(
            num_scalar_prefetch=0,
            grid=(grid,),
            in_specs=[
                pl.BlockSpec((tb, F), lambda i: (i, 0)),           # activations
                pl.BlockSpec((F, HID), lambda i: (0, 0)),          # w1 (resident)
                pl.BlockSpec((3, HID, HID), lambda i: (0, 0, 0)),  # w2..w4 (resident)
                pl.BlockSpec((4, HID), lambda i: (0, 0)),          # biases (resident)
            ],
            out_specs=pl.BlockSpec((tb, HID), lambda i: (i, 0)),
        ),
        compiler_params=pltpu.CompilerParams(
            dimension_semantics=("parallel",)),
    )(x, w1, packed_w, packed_b)

    # TODO(synk): a batch-on-lanes (transposed) layout would make every store
    # an unmasked 128-lane vst; at HID=16 the padded store + outside slice is
    # the cheap, low-risk option.
    return out[:B, :out_size]


def xavier_uniform(key, fan_in, fan_out, dtype=jnp.float32):
    # Matches torch.nn.init.xavier_uniform_ (gain=1.0); stored as (in, out).
    limit = math.sqrt(6.0 / (fan_in + fan_out))
    return jax.random.uniform(key, (fan_in, fan_out), dtype=dtype,
                              minval=-limit, maxval=limit)


def linear_bias(key, fan_in, fan_out, dtype=jnp.float32):
    # Matches torch.nn.Linear default bias init: U(-1/sqrt(fan_in), 1/sqrt(fan_in)).
    bound = 1.0 / math.sqrt(fan_in)
    return jax.random.uniform(key, (fan_out,), dtype=dtype,
                              minval=-bound, maxval=bound)


def init_params(key, input_size, output_size):
    kw1, kw2, kw3, kw4, kb1, kb2, kb3, kb4 = jax.random.split(key, 8)
    return {
        "w1": xavier_uniform(kw1, input_size, HID),
        "b1": linear_bias(kb1, input_size, HID),
        "w2": xavier_uniform(kw2, HID, HID),
        "b2": linear_bias(kb2, HID, HID),
        "w3": xavier_uniform(kw3, HID, HID),
        "b3": linear_bias(kb3, HID, HID),
        "w4": xavier_uniform(kw4, HID, output_size),
        "b4": linear_bias(kb4, HID, output_size),
    }


def pack_params(params, output_size):
    """w1 stays native (input_size, HID); layers 2-4 are zero-padded to
    (HID, HID) and stacked; all biases are zero-padded to width HID."""
    assert output_size <= HID, "output_size must be <= HID for packed w4/b4"

    def pad_w(w):
        r, c = w.shape
        assert r <= HID and c <= HID
        return jnp.pad(w, ((0, HID - r), (0, HID - c)))

    def pad_b(b):
        return jnp.pad(b.reshape(-1), (0, HID - b.size))

    w1 = params["w1"]
    packed_w = jnp.stack([pad_w(params["w2"]), pad_w(params["w3"]),
                          pad_w(params["w4"])])
    packed_b = jnp.stack([pad_b(params["b1"]), pad_b(params["b2"]),
                          pad_b(params["b3"]), pad_b(params["b4"])])
    return w1, packed_w, packed_b


def reference_forward(x, params):
    h = jnp.maximum(x @ params["w1"] + params["b1"][None, :], 0.0)
    h = jnp.maximum(h @ params["w2"] + params["b2"][None, :], 0.0)
    h = jnp.maximum(h @ params["w3"] + params["b3"][None, :], 0.0)
    return h @ params["w4"] + params["b4"][None, :]


if __name__ == "__main__":
    # CartPole: observation dim = 4, action dim = 2.
    input_size, output_size = 4, 2

    key = jax.random.PRNGKey(0)
    k_params, k_x_small, k_x_big, k_x_one = jax.random.split(key, 4)

    params = init_params(k_params, input_size, output_size)
    w1, packed_w, packed_b = pack_params(params, output_size)

    # 1) tiny per-env-step batch (single block, no grid iteration overhead)
    x_small = jax.random.normal(k_x_small, (8, input_size), dtype=jnp.float32)
    out_small = jax.block_until_ready(
        fully_connected_forward(x_small, w1, packed_w, packed_b, output_size))
    ref_small = reference_forward(x_small, params)
    assert out_small.shape == (8, output_size)
    assert jnp.allclose(out_small, ref_small, atol=1e-5, rtol=1e-5)

    # 2) replay-buffer-sized batch: auto tb=128 -> 2 grid steps ("parallel")
    x_big = jax.random.normal(k_x_big, (256, input_size), dtype=jnp.float32)
    out_big = jax.block_until_ready(
        fully_connected_forward(x_big, w1, packed_w, packed_b, output_size))
    ref_big = reference_forward(x_big, params)
    assert out_big.shape == (256, output_size)
    assert jnp.allclose(out_big, ref_big, atol=1e-5, rtol=1e-5)

    # 3) single-observation-style batch (B < 8 -> padded to one 8-row block)
    x_one = jax.random.normal(k_x_one, (3, input_size), dtype=jnp.float32)
    out_one = jax.block_until_ready(
        fully_connected_forward(x_one, w1, packed_w, packed_b, output_size))
    ref_one = reference_forward(x_one, params)
    assert out_one.shape == (3, output_size)
    assert jnp.allclose(out_one, ref_one, atol=1e-5, rtol=1e-5)

    print("KERNEL_OK")
</pallas_src>

<mosaic_0001>
module attributes {stable_mosaic.version = 11 : i64} {
  func.func @mlp_kernel(%arg0: i32, %arg1: memref<8x4xf32, #tpu.memory_space<vmem>>, %arg2: memref<4x16xf32, #tpu.memory_space<vmem>>, %arg3: memref<3x16x16xf32, #tpu.memory_space<vmem>>, %arg4: memref<4x16xf32, #tpu.memory_space<vmem>>, %arg5: memref<8x16xf32, #tpu.memory_space<vmem>>) attributes {dimension_semantics = [#tpu.dimension_semantics<parallel>], iteration_bounds = array<i64: 1>, scalar_prefetch = 0 : i64, scratch_operands = 0 : i64, tpu.core_type = #tpu.core_type<tc>, window_params = [{transform_indices = @transform_0, window_bounds = array<i64: 8, 4>}, {pipeline_mode = #tpu.pipeline_mode<synchronous>, transform_indices = @transform_1, window_bounds = array<i64: 4, 16>}, {pipeline_mode = #tpu.pipeline_mode<synchronous>, transform_indices = @transform_2, window_bounds = array<i64: 3, 16, 16>}, {pipeline_mode = #tpu.pipeline_mode<synchronous>, transform_indices = @transform_3, window_bounds = array<i64: 4, 16>}, {transform_indices = @transform_4, window_bounds = array<i64: 8, 16>}]} {
    %c0 = arith.constant 0 : index
    %c0_0 = arith.constant 0 : index
    %0 = vector.load %arg1[%c0, %c0_0] : memref<8x4xf32, #tpu.memory_space<vmem>>, vector<8x4xf32>
    %c0_1 = arith.constant 0 : index
    %c0_2 = arith.constant 0 : index
    %1 = vector.load %arg2[%c0_1, %c0_2] : memref<4x16xf32, #tpu.memory_space<vmem>>, vector<4x16xf32>
    %cst = arith.constant dense<0.000000e+00> : vector<8x16xf32>
    %2 = tpu.matmul %0, %1, %cst {dimension_numbers = #tpu.dot_dimension_numbers<[1], [0], [0], [1], [0, 0, 1, 1], [], []>} : vector<8x4xf32>, vector<4x16xf32>, vector<8x16xf32> -> vector<8x16xf32>
    %c0_3 = arith.constant 0 : index
    %c0_4 = arith.constant 0 : index
    %3 = vector.load %arg4[%c0_3, %c0_4] : memref<4x16xf32, #tpu.memory_space<vmem>>, vector<1x16xf32>
    %4 = vector.broadcast %3 : vector<1x16xf32> to vector<8x16xf32>
    %5 = arith.addf %2, %4 : vector<8x16xf32>
    %cst_5 = arith.constant 0.000000e+00 : f32
    %6 = vector.broadcast %cst_5 : f32 to vector<8x16xf32>
    %7 = arith.maximumf %5, %6 : vector<8x16xf32>
    %c0_6 = arith.constant 0 : index
    %c0_7 = arith.constant 0 : index
    %c0_8 = arith.constant 0 : index
    %8 = vector.load %arg3[%c0_6, %c0_7, %c0_8] : memref<3x16x16xf32, #tpu.memory_space<vmem>>, vector<1x16x16xf32>
    %9 = vector.shape_cast %8 : vector<1x16x16xf32> to vector<16x16xf32>
    %cst_9 = arith.constant dense<0.000000e+00> : vector<8x16xf32>
    %10 = tpu.matmul %7, %9, %cst_9 {dimension_numbers = #tpu.dot_dimension_numbers<[1], [0], [0], [1], [0, 0, 1, 1], [], []>} : vector<8x16xf32>, vector<16x16xf32>, vector<8x16xf32> -> vector<8x16xf32>
    %c1 = arith.constant 1 : index
    %c0_10 = arith.constant 0 : index
    %11 = vector.load %arg4[%c1, %c0_10] : memref<4x16xf32, #tpu.memory_space<vmem>>, vector<1x16xf32>
    %12 = vector.broadcast %11 : vector<1x16xf32> to vector<8x16xf32>
    %13 = arith.addf %10, %12 : vector<8x16xf32>
    %cst_11 = arith.constant 0.000000e+00 : f32
    %14 = vector.broadcast %cst_11 : f32 to vector<8x16xf32>
    %15 = arith.maximumf %13, %14 : vector<8x16xf32>
    %c1_12 = arith.constant 1 : index
    %c0_13 = arith.constant 0 : index
    %c0_14 = arith.constant 0 : index
    %16 = vector.load %arg3[%c1_12, %c0_13, %c0_14] : memref<3x16x16xf32, #tpu.memory_space<vmem>>, vector<1x16x16xf32>
    %17 = vector.shape_cast %16 : vector<1x16x16xf32> to vector<16x16xf32>
    %cst_15 = arith.constant dense<0.000000e+00> : vector<8x16xf32>
    %18 = tpu.matmul %15, %17, %cst_15 {dimension_numbers = #tpu.dot_dimension_numbers<[1], [0], [0], [1], [0, 0, 1, 1], [], []>} : vector<8x16xf32>, vector<16x16xf32>, vector<8x16xf32> -> vector<8x16xf32>
    %c2 = arith.constant 2 : index
    %c0_16 = arith.constant 0 : index
    %19 = vector.load %arg4[%c2, %c0_16] : memref<4x16xf32, #tpu.memory_space<vmem>>, vector<1x16xf32>
    %20 = vector.broadcast %19 : vector<1x16xf32> to vector<8x16xf32>
    %21 = arith.addf %18, %20 : vector<8x16xf32>
    %cst_17 = arith.constant 0.000000e+00 : f32
    %22 = vector.broadcast %cst_17 : f32 to vector<8x16xf32>
    %23 = arith.maximumf %21, %22 : vector<8x16xf32>
    %c2_18 = arith.constant 2 : index
    %c0_19 = arith.constant 0 : index
    %c0_20 = arith.constant 0 : index
    %24 = vector.load %arg3[%c2_18, %c0_19, %c0_20] : memref<3x16x16xf32, #tpu.memory_space<vmem>>, vector<1x16x16xf32>
    %25 = vector.shape_cast %24 : vector<1x16x16xf32> to vector<16x16xf32>
    %cst_21 = arith.constant dense<0.000000e+00> : vector<8x16xf32>
    %26 = tpu.matmul %23, %25, %cst_21 {dimension_numbers = #tpu.dot_dimension_numbers<[1], [0], [0], [1], [0, 0, 1, 1], [], []>} : vector<8x16xf32>, vector<16x16xf32>, vector<8x16xf32> -> vector<8x16xf32>
    %c3 = arith.constant 3 : index
    %c0_22 = arith.constant 0 : index
    %27 = vector.load %arg4[%c3, %c0_22] : memref<4x16xf32, #tpu.memory_space<vmem>>, vector<1x16xf32>
    %28 = vector.broadcast %27 : vector<1x16xf32> to vector<8x16xf32>
    %29 = arith.addf %26, %28 : vector<8x16xf32>
    %c0_23 = arith.constant 0 : index
    %c0_24 = arith.constant 0 : index
    %30 = vector.load %arg5[%c0_23, %c0_24] : memref<8x16xf32, #tpu.memory_space<vmem>>, vector<8x16xf32>
    tpu.vector_store %arg5[%c0_23, %c0_24], %29 {strides = array<i32>} : memref<8x16xf32, #tpu.memory_space<vmem>>, vector<8x16xf32>,
    return
  }
  func.func @transform_0(%arg0: i32) -> (i32, i32) {
    %c0_i32 = arith.constant 0 : i32
    %c0_i32_0 = arith.constant 0 : i32
    return %arg0, %c0_i32 : i32, i32
  }
  func.func @transform_1(%arg0: i32) -> (i32, i32) {
    %c0_i32 = arith.constant 0 : i32
    %c0_i32_0 = arith.constant 0 : i32
    %c0_i32_1 = arith.constant 0 : i32
    return %c0_i32, %c0_i32_0 : i32, i32
  }
  func.func @transform_2(%arg0: i32) -> (i32, i32, i32) {
    %c0_i32 = arith.constant 0 : i32
    %c0_i32_0 = arith.constant 0 : i32
    %c0_i32_1 = arith.constant 0 : i32
    %c0_i32_2 = arith.constant 0 : i32
    return %c0_i32, %c0_i32_0, %c0_i32_1 : i32, i32, i32
  }
  func.func @transform_3(%arg0: i32) -> (i32, i32) {
    %c0_i32 = arith.constant 0 : i32
    %c0_i32_0 = arith.constant 0 : i32
    %c0_i32_1 = arith.constant 0 : i32
    return %c0_i32, %c0_i32_0 : i32, i32
  }
  func.func @transform_4(%arg0: i32) -> (i32, i32) {
    %c0_i32 = arith.constant 0 : i32
    %c0_i32_0 = arith.constant 0 : i32
    return %arg0, %c0_i32 : i32, i32
  }
}

</mosaic_0001>

<llo_original>
// kernel: tpu_custom_call.1
$region0: #{tpu_custom_call.1}
  #allocation0 [shape = 'u32[]', space=smem, size = 0x4, offset = 0x4, fixed_abs, tag = 'smem constant byte address 0x4 - core index']
  #allocation1 [shape = 'u32[72,128]{1,0:T(1,128)}', space=vmem, size = 0x9000, scoped, tag = 'internal scratch']
  %s0 = inlined_call_operand.vmem [shape: f32[8,4], index: 0, kind: input, shape index: {}]
  %s1 = inlined_call_operand.vmem [shape: f32[4,16], index: 1, kind: input, shape index: {}]
  %s2 = inlined_call_operand.hbm [shape: f32[3,16,16], index: 2, kind: input, shape index: {}]
  %s3 = inlined_call_operand.vmem [shape: f32[4,16], index: 3, kind: input, shape index: {}]
  %s4 = inlined_call_operand.hbm [shape: f32[8,16], index: 4, kind: output, shape index: {}]
  %s5 = sld [smem:[#allocation0]]
  $region30: #{tpu_custom_call.1} parent=0
    _
  %s7 = ssub.s32 1, %s5
  %s8 = scalar_select 0, %s7, %s5
  $region1: #{tpu_custom_call.1} parent=0
    #allocation2 [shape = 'u8[24576]{0}', space=vmem, size = 0x6000, scoped, tag = 'input window, operand 2, single buffered']
    #allocation3 [shape = 's32[1]{0}', space=sflag, size = 0x4, scoped, tag = 'scoped memory for tpu_custom_call.1']
    #allocation4 [shape = 's32[1]{0}', space=sflag, size = 0x4, scoped, tag = 'scoped memory for tpu_custom_call.1']
    #allocation5 [shape = 'u8[4096]{0}', space=vmem, size = 0x1000, scoped, tag = 'output window, operand 0, single buffered']
    %9 = vsyncpa [#allocation3], 0
    %10 = vsyncpa [#allocation4], 0
    // Predicated region
    $region2: #{tpu_custom_call.1} parent=1 // pred_check
      _
    $region3: #{tpu_custom_call.1} parent=1 // pred_check_branch
      %12 = sbr.rel (0) target = $region5
    $region4: #{tpu_custom_call.1} parent=1 // pred_region
      _
    $region5: #{tpu_custom_call.1} parent=1 // pred_fallthru
      _
    // Predicated region
    $region6: #{tpu_custom_call.1} parent=1 // pred_check
      _
    $region7: #{tpu_custom_call.1} parent=1 // pred_check_branch
      %14 = sbr.rel (0) target = $region9
    $region8: #{tpu_custom_call.1} parent=1 // pred_region
      _
    $region9: #{tpu_custom_call.1} parent=1 // pred_fallthru
      _
    // Predicated region
    $region10: #{tpu_custom_call.1} parent=1 // pred_check
      _
    $region11: #{tpu_custom_call.1} parent=1 // pred_check_branch
      %16 = sbr.rel (0) target = $region13
    $region12: #{tpu_custom_call.1} parent=1 // pred_region
      %18 = vsyncadd [#allocation3], 0
      %s19 = sshll.u32 %s2, 4
      %s20 = int_to_ptr.hbm [resolvable:$true] %s19
      %s21 = sshll.u32 [#allocation2], 4
      %s22 = int_to_ptr.vmem [resolvable:$true] %s21
      %27 = dma.hbm_to_vmem [thread:$0]  %s20, 768, %s22, [#allocation3], 128, 128, 8
    $region13: #{tpu_custom_call.1} parent=1 // pred_fallthru
      _
    // Predicated region
    $region14: #{tpu_custom_call.1} parent=1 // pred_check
      _
    $region15: #{tpu_custom_call.1} parent=1 // pred_check_branch
      %29 = sbr.rel (0) target = $region17
    $region16: #{tpu_custom_call.1} parent=1 // pred_region
      _
    $region17: #{tpu_custom_call.1} parent=1 // pred_fallthru
      _
    // Predicated region
    $region18: #{tpu_custom_call.1} parent=1 // pred_check
      _
    $region19: #{tpu_custom_call.1} parent=1 // pred_check_branch
      %31 = sbr.rel (0) target = $region21
    $region20: #{tpu_custom_call.1} parent=1 // pred_region
      %33 = dma.done [#allocation3], 768
    $region21: #{tpu_custom_call.1} parent=1 // pred_fallthru
      _
    %v34 = vld [vmem:[%s0] sm:$0xff]
    %v35 = vld [vmem:[%s1] sm:$0xf]
    %v36 = vld [vmem:[%s3] sm:$0x1]
    %v37 = vperm.slane %v36, 0
    %vm38 = vcmask 31744
    %v40 = vsel %vm38, %v34, 0
    %vm42 = vcmask 1043456
    %v44 = vsel %vm42, %v35, 0
    %46 = vmatpush.msra.mxu0 0.0
    %47 = vmatpush.msra.mxu0 0.0
    %48 = vmatpush.msra.mxu0 0.0
    %49 = vmatpush.msra.mxu0 0.0
    %50 = vmatpush.msra.mxu0 0.0
    %51 = vmatpush.msra.mxu0 0.0
    %52 = vmatpush.msra.mxu0 0.0
    %53 = vmatpush.msra.mxu0 0.0
    %54 = vmatpush.msra.mxu0 0.0
    %55 = vmatpush.msra.mxu0 0.0
    %56 = vmatpush.msra.mxu0 0.0
    %57 = vmatpush.msra.mxu0 0.0
    %58 = vmatpush.msra.mxu0 0.0
    %59 = vmatpush.msra.mxu0 0.0
    %60 = vmatpush.msra.mxu0 0.0
    %61 = vmatpush.msra.mxu0 %v44
    %62 = vmatmul.f32.gmra.mxu0 %v40
    %v63 = vpop.f32.mrf.mxu0
    %v64 = vadd.f32 %v37, %v63
    %65 = vdwg.mxu0
    %v66 = vmax.f32 %v64, 0.0
    %v67 = vld [vmem:[#allocation2] sm:$0xff]
    %v68 = vld [vmem:[#allocation2 + $0x8] sm:$0xff]
    %v69 = vld [vmem:[%s3 + $0x1] sm:$0x1]
    %v70 = vperm.slane %v69, 0
    %vm71 = vcmask 130048
    %v73 = vsel %vm71, %v66, 0
    %75 = vmatpush.msra.mxu0 0.0
    %76 = vmatpush.msra.mxu0 0.0
    %77 = vmatpush.msra.mxu0 0.0
    %78 = vmatpush.msra.mxu0 0.0
    %79 = vmatpush.msra.mxu0 0.0
    %80 = vmatpush.msra.mxu0 0.0
    %81 = vmatpush.msra.mxu0 0.0
    %82 = vmatpush.msra.mxu0 0.0
    %83 = vmatpush.msra.mxu0 0.0
    %84 = vmatpush.msra.mxu0 0.0
    %85 = vmatpush.msra.mxu0 0.0
    %86 = vmatpush.msra.mxu0 0.0
    %87 = vmatpush.msra.mxu0 0.0
    %88 = vmatpush.msra.mxu0 0.0
    %89 = vmatpush.msra.mxu0 %v68
    %90 = vmatpush.msra.mxu0 %v67
    %91 = vmatmul.f32.gmra.mxu0 %v73
    %v92 = vpop.f32.mrf.mxu0
    %v93 = vadd.f32 %v70, %v92
    %94 = vdwg.mxu0
    %v95 = vmax.f32 %v93, 0.0
    %s96 = scalar_lea.vmem [#allocation2], 16
    %v97 = vld [vmem:[%s96] sm:$0xff]
    %v98 = vld [vmem:[%s96 + $0x8] sm:$0xff]
    %v99 = vld [vmem:[%s3 + $0x2] sm:$0x1]
    %v100 = vperm.slane %v99, 0
    %v102 = vsel %vm71, %v95, 0
    %104 = vmatpush.msra.mxu0 0.0
    %105 = vmatpush.msra.mxu0 0.0
    %106 = vmatpush.msra.mxu0 0.0
    %107 = vmatpush.msra.mxu0 0.0
    %108 = vmatpush.msra.mxu0 0.0
    %109 = vmatpush.msra.mxu0 0.0
    %110 = vmatpush.msra.mxu0 0.0
    %111 = vmatpush.msra.mxu0 0.0
    %112 = vmatpush.msra.mxu0 0.0
    %113 = vmatpush.msra.mxu0 0.0
    %114 = vmatpush.msra.mxu0 0.0
    %115 = vmatpush.msra.mxu0 0.0
    %116 = vmatpush.msra.mxu0 0.0
    %117 = vmatpush.msra.mxu0 0.0
    %118 = vmatpush.msra.mxu0 %v98
    %119 = vmatpush.msra.mxu0 %v97
    %120 = vmatmul.f32.gmra.mxu0 %v102
    %v121 = vpop.f32.mrf.mxu0
    %v122 = vadd.f32 %v100, %v121
    %123 = vdwg.mxu0
    %v124 = vmax.f32 %v122, 0.0
    %s125 = scalar_lea.vmem [#allocation2], 32
    %v126 = vld [vmem:[%s125] sm:$0xff]
    %v127 = vld [vmem:[%s125 + $0x8] sm:$0xff]
    %v128 = vld [vmem:[%s3 + $0x3] sm:$0x1]
    %v129 = vperm.slane %v128, 0
    %v131 = vsel %vm71, %v124, 0
    %133 = vmatpush.msra.mxu0 0.0
    %134 = vmatpush.msra.mxu0 0.0
    %135 = vmatpush.msra.mxu0 0.0
    %136 = vmatpush.msra.mxu0 0.0
    %137 = vmatpush.msra.mxu0 0.0
    %138 = vmatpush.msra.mxu0 0.0
    %139 = vmatpush.msra.mxu0 0.0
    %140 = vmatpush.msra.mxu0 0.0
    %141 = vmatpush.msra.mxu0 0.0
    %142 = vmatpush.msra.mxu0 0.0
    %143 = vmatpush.msra.mxu0 0.0
    %144 = vmatpush.msra.mxu0 0.0
    %145 = vmatpush.msra.mxu0 0.0
    %146 = vmatpush.msra.mxu0 0.0
    %147 = vmatpush.msra.mxu0 %v127
    %148 = vmatpush.msra.mxu0 %v126
    %149 = vmatmul.f32.gmra.mxu0 %v131
    %v150 = vpop.f32.mrf.mxu0
    %v151 = vadd.f32 %v129, %v150
    %152 = vdwg.mxu0
    %153 = vst.msk [vmem:[#allocation5] sm:$0xff] %vm71, %v151
    // Predicated region
    $region22: #{tpu_custom_call.1} parent=1 // pred_check
      _
    $region23: #{tpu_custom_call.1} parent=1 // pred_check_branch
      %155 = sbr.rel (0) target = $region25
    $region24: #{tpu_custom_call.1} parent=1 // pred_region
      %157 = vsyncadd [#allocation4], 0
      %s159 = sshll.u32 [#allocation5], 4
      %s160 = int_to_ptr.vmem [resolvable:$true] %s159
      %s161 = sshll.u32 %s4, 4
      %s162 = int_to_ptr.hbm [resolvable:$true] %s161
      %164 = dma.vmem_to_hbm [thread:$0]  %s160, 128, %s162, [#allocation4]
    $region25: #{tpu_custom_call.1} parent=1 // pred_fallthru
      _
    // Predicated region
    $region26: #{tpu_custom_call.1} parent=1 // pred_check
      _
    $region27: #{tpu_custom_call.1} parent=1 // pred_check_branch
      %166 = sbr.rel (0) target = $region29
    $region28: #{tpu_custom_call.1} parent=1 // pred_region
      %168 = dma.done [#allocation4], 128
    $region29: #{tpu_custom_call.1} parent=1 // pred_fallthru
      _
    %169 = vsyncpa [#allocation3], 1
    %170 = vsyncpa [#allocation4], 1

</llo_original>
